<compile_context>
chip_gen: v5e
topology: v5e:2x2
jax: 0.10.0
libtpu: 0.0.40
codegen_flags: <defaults>
</compile_context>

<pallas_src>
import math

import jax
import jax.numpy as jnp
from jax.experimental import pallas as pl
from jax.experimental.pallas import tpu as pltpu


def _freq_gain_kernel(x_ref, scale_ref, o_ref):
    # x_ref: (TR, L) input tile; scale_ref: (1, L) gain row (resident across the
    # grid); o_ref: (TR, L).  The (1, L) gain broadcasts over sublanes for free;
    # one vmul per vreg.
    o_ref[...] = (x_ref[...] * scale_ref[...]).astype(o_ref.dtype)


_TARGET_BLOCK_BYTES = 8 * 1024 * 1024    # ~8 MiB input block: per-step overhead <7% on v7x,
                                         # already negligible on v5e/v6e
_MAX_LANES = 1024                        # lane-dense width cap (8 f32 vregs per row)
_VMEM_CEILING_BYTES = 48 * 1024 * 1024   # keep derived footprint well under v7x's 64 MiB phys
_VMEM_SLACK_BYTES = 2 * 1024 * 1024
_VMEM_FLOOR_BYTES = 16 * 1024 * 1024     # never request below the smallest chip default


def _sublane_multiple(itemsize):
    # f32 -> 8, bf16 -> 16, int8/fp8 -> 32 (sub-32-bit dtypes pack along sublanes)
    return max(8, 32 // max(1, itemsize))


def _pick_fold(rows, F):
    """Smallest fold making fold*F a multiple of 128, grown up to _MAX_LANES.

    Prefers a fold that divides `rows` exactly (no tail); otherwise returns the
    largest candidate and the (tiny, < fold rows) tail is handled outside the
    kernel with a plain JAX broadcast multiply.
    """
    min_fold = 128 // math.gcd(F, 128)
    candidates = [min_fold]
    f = min_fold
    while 2 * f * F <= _MAX_LANES:
        f *= 2
        candidates.append(f)
    divisible = [f for f in candidates if rows % f == 0]
    return divisible[-1] if divisible else candidates[-1]


def _pick_row_tile(n_rows, lanes, in_itemsize, out_itemsize, sub):
    """Largest row tile (multiple of `sub`, or full extent) within the budgets."""
    if n_rows <= sub:
        return n_rows                      # full extent is always legal
    tr_target = _TARGET_BLOCK_BYTES // max(1, lanes * in_itemsize)
    per_row = lanes * (in_itemsize + out_itemsize)
    tr_vmem = (_VMEM_CEILING_BYTES - _VMEM_SLACK_BYTES) // max(1, 2 * per_row)
    tr = max(sub, min(tr_target, tr_vmem, n_rows))
    if tr < n_rows:
        tr = max(sub, (tr // sub) * sub)   # dtype-aware sublane packing
    # Guarantee >= 2 blocks so the "parallel" grid axis shards across both v7x TCs.
    if pl.cdiv(n_rows, tr) < 2 and n_rows > sub:
        half = pl.cdiv(n_rows, 2)
        tr = max(sub, ((half + sub - 1) // sub) * sub)
        if tr >= n_rows:                   # safety; unreachable for n_rows > sub
            tr = max(sub, (n_rows // 2 // sub) * sub)
    return tr


def freq_gain(x, scale, out_dtype=None):
    """x: (B, C, T, F); scale: per-frequency gain of size F (any leading 1-dims ok)."""
    B, C, T, F = x.shape
    scale = scale.reshape(-1)
    assert scale.shape[0] == F, "scale must have freq_dim elements"

    rows = B * C * T
    if out_dtype is None:
        # Strict torch promotion.  TODO(synk): in bf16 models, pass
        # out_dtype=x.dtype to halve write bandwidth (modeling decision).
        out_dtype = jnp.promote_types(x.dtype, scale.dtype)
    in_itemsize = jnp.dtype(x.dtype).itemsize
    out_itemsize = jnp.dtype(out_dtype).itemsize

    x_flat = x.reshape(rows, F)
    scale_out = scale.astype(out_dtype)

    fold = _pick_fold(rows, F)
    main_rows = (rows // fold) * fold      # largest lane-dense prefix

    outputs = []
    if main_rows > 0:
        lanes = fold * F
        rows2 = main_rows // fold
        x2d = x_flat[:main_rows].reshape(rows2, lanes)
        # Gain row over the folded lane axis: `fold` consecutive copies of scale.
        scale_row = jnp.tile(scale_out, (fold,)).reshape(1, lanes)

        sub = _sublane_multiple(in_itemsize)
        tr = _pick_row_tile(rows2, lanes, in_itemsize, out_itemsize, sub)
        grid = (pl.cdiv(rows2, tr),)       # ragged last block handled by Pallas

        # Derived scoped-VMEM limit: double-buffered in+out blocks + gain + slack.
        vmem_limit = int(
            2 * tr * lanes * (in_itemsize + out_itemsize)
            + 2 * lanes * out_itemsize
            + _VMEM_SLACK_BYTES
        )
        vmem_limit = max(vmem_limit, _VMEM_FLOOR_BYTES)

        cost = pl.CostEstimate(
            flops=main_rows * F,
            transcendentals=0,
            bytes_accessed=main_rows * F * (in_itemsize + out_itemsize)
            + lanes * out_itemsize,
        )

        out2d = pl.pallas_call(
            _freq_gain_kernel,
            out_shape=jax.ShapeDtypeStruct((rows2, lanes), out_dtype),
            grid_spec=pltpu.PrefetchScalarGridSpec(
                num_scalar_prefetch=0,
                grid=grid,
                in_specs=[
                    pl.BlockSpec((tr, lanes), lambda i: (i, 0)),   # input row tile
                    pl.BlockSpec((1, lanes), lambda i: (0, 0)),    # gain row, resident
                ],
                out_specs=pl.BlockSpec((tr, lanes), lambda i: (i, 0)),
            ),
            compiler_params=pltpu.CompilerParams(
                dimension_semantics=("parallel",),   # shard row grid across TCs on v7x
                vmem_limit_bytes=vmem_limit,
            ),
            cost_estimate=cost,
        )(x2d, scale_row)
        outputs.append(out2d.reshape(main_rows, F))

    if main_rows < rows:
        # Tiny tail (< fold rows * F elems): plain JAX broadcast multiply keeps
        # the lane-dense kernel path for essentially all of the data.
        tail = x_flat[main_rows:].astype(out_dtype) * scale_out.reshape(1, F)
        outputs.append(tail)

    out_flat = outputs[0] if len(outputs) == 1 else jnp.concatenate(outputs, axis=0)
    return out_flat.reshape(B, C, T, F)


if __name__ == "__main__":
    key = jax.random.PRNGKey(0)
    kx, ks, kx2 = jax.random.split(key, 3)

    # Shapes consistent with the module: (B, C, T, freq_dim)
    B, C, T, F = 2, 4, 16, 16
    x = jax.random.normal(kx, (B, C, T, F), dtype=jnp.float32)
    # PyTorch initializes scale to ones; perturb deterministically so the
    # multiply is actually exercised.
    scale = jnp.ones((F,), dtype=jnp.float32) + 0.1 * jax.random.normal(
        ks, (F,), dtype=jnp.float32
    )

    out = freq_gain(x, scale)
    jax.block_until_ready(out)
    ref = x * scale.reshape(1, 1, 1, F)
    assert out.shape == x.shape
    assert out.dtype == ref.dtype
    assert jnp.allclose(out, ref, atol=1e-6, rtol=1e-6)

    # Second check: row count NOT divisible by the fold -> exercises the
    # lane-dense prefix + plain-JAX tail split.
    B2, C2, T2 = 1, 7, 11
    x2 = jax.random.normal(kx2, (B2, C2, T2, F), dtype=jnp.float32)
    out2 = freq_gain(x2, scale)
    jax.block_until_ready(out2)
    ref2 = x2 * scale.reshape(1, 1, 1, F)
    assert out2.shape == x2.shape
    assert jnp.allclose(out2, ref2, atol=1e-6, rtol=1e-6)

    print("KERNEL_OK")
</pallas_src>

<mosaic_0001>
module attributes {stable_mosaic.version = 11 : i64} {
  func.func @_freq_gain_kernel(%arg0: i32, %arg1: memref<2x1024xf32, #tpu.memory_space<vmem>>, %arg2: memref<1x1024xf32, #tpu.memory_space<vmem>>, %arg3: memref<2x1024xf32, #tpu.memory_space<vmem>>) attributes {dimension_semantics = [#tpu.dimension_semantics<parallel>], iteration_bounds = array<i64: 1>, scalar_prefetch = 0 : i64, scratch_operands = 0 : i64, tpu.core_type = #tpu.core_type<tc>, window_params = [{transform_indices = @transform_0, window_bounds = array<i64: 2, 1024>}, {pipeline_mode = #tpu.pipeline_mode<synchronous>, transform_indices = @transform_1, window_bounds = array<i64: 1, 1024>}, {transform_indices = @transform_2, window_bounds = array<i64: 2, 1024>}]} {
    %c0 = arith.constant 0 : index
    %c0_0 = arith.constant 0 : index
    %0 = vector.load %arg1[%c0, %c0_0] : memref<2x1024xf32, #tpu.memory_space<vmem>>, vector<2x1024xf32>
    %c0_1 = arith.constant 0 : index
    %c0_2 = arith.constant 0 : index
    %1 = vector.load %arg2[%c0_1, %c0_2] : memref<1x1024xf32, #tpu.memory_space<vmem>>, vector<1x1024xf32>
    %2 = vector.broadcast %1 : vector<1x1024xf32> to vector<2x1024xf32>
    %3 = arith.mulf %0, %2 : vector<2x1024xf32>
    %c0_3 = arith.constant 0 : index
    %c0_4 = arith.constant 0 : index
    %4 = vector.load %arg3[%c0_3, %c0_4] : memref<2x1024xf32, #tpu.memory_space<vmem>>, vector<2x1024xf32>
    tpu.vector_store %arg3[%c0_3, %c0_4], %3 {strides = array<i32>} : memref<2x1024xf32, #tpu.memory_space<vmem>>, vector<2x1024xf32>,
    return
  }
  func.func @transform_0(%arg0: i32) -> (i32, i32) {
    %c0_i32 = arith.constant 0 : i32
    %c0_i32_0 = arith.constant 0 : i32
    return %arg0, %c0_i32 : i32, i32
  }
  func.func @transform_1(%arg0: i32) -> (i32, i32) {
    %c0_i32 = arith.constant 0 : i32
    %c0_i32_0 = arith.constant 0 : i32
    %c0_i32_1 = arith.constant 0 : i32
    return %c0_i32, %c0_i32_0 : i32, i32
  }
  func.func @transform_2(%arg0: i32) -> (i32, i32) {
    %c0_i32 = arith.constant 0 : i32
    %c0_i32_0 = arith.constant 0 : i32
    return %arg0, %c0_i32 : i32, i32
  }
}

</mosaic_0001>

<llo_original>
// kernel: tpu_custom_call.1
$region0: #{tpu_custom_call.1}
  #allocation0 [shape = 'u32[]', space=smem, size = 0x4, offset = 0x4, fixed_abs, tag = 'smem constant byte address 0x4 - core index']
  #allocation1 [shape = 'u32[72,128]{1,0:T(1,128)}', space=vmem, size = 0x9000, scoped, tag = 'internal scratch']
  %s0 = inlined_call_operand.hbm [shape: f32[2,1024], index: 0, kind: input, shape index: {}]
  %s1 = inlined_call_operand.hbm [shape: f32[1,1024], index: 1, kind: input, shape index: {}]
  %s2 = inlined_call_operand.hbm [shape: f32[2,1024], index: 2, kind: output, shape index: {}]
  %s3 = sld [smem:[#allocation0]]
  $region26: #{tpu_custom_call.1} parent=0
    _
  %s5 = ssub.s32 1, %s3
  %s6 = scalar_select 0, %s5, %s3
  $region1: #{tpu_custom_call.1} parent=0
    #allocation2 [shape = 'u8[8192]{0}', space=vmem, size = 0x2000, scoped, tag = 'input window, operand 0, single buffered']
    #allocation3 [shape = 's32[1]{0}', space=sflag, size = 0x4, scoped, tag = 'scoped memory for tpu_custom_call.1']
    #allocation4 [shape = 's32[1]{0}', space=sflag, size = 0x4, scoped, tag = 'scoped memory for tpu_custom_call.1']
    #allocation5 [shape = 'u8[4096]{0}', space=vmem, size = 0x1000, scoped, tag = 'input window, operand 1, single buffered']
    #allocation6 [shape = 's32[1]{0}', space=sflag, size = 0x4, scoped, tag = 'scoped memory for tpu_custom_call.1']
    #allocation7 [shape = 'u8[8192]{0}', space=vmem, size = 0x2000, scoped, tag = 'output window, operand 0, single buffered']
    %7 = vsyncpa [#allocation3], 0
    %8 = vsyncpa [#allocation6], 0
    %9 = vsyncpa [#allocation4], 0
    // Predicated region
    $region2: #{tpu_custom_call.1} parent=1 // pred_check
      _
    $region3: #{tpu_custom_call.1} parent=1 // pred_check_branch
      %11 = sbr.rel (0) target = $region5
    $region4: #{tpu_custom_call.1} parent=1 // pred_region
      %13 = vsyncadd [#allocation3], 0
      %s15 = sshll.u32 %s0, 4
      %s16 = int_to_ptr.hbm [resolvable:$true] %s15
      %s17 = sshll.u32 [#allocation2], 4
      %s18 = int_to_ptr.vmem [resolvable:$true] %s17
      %20 = dma.hbm_to_vmem [thread:$0]  %s16, 256, %s18, [#allocation3]
    $region5: #{tpu_custom_call.1} parent=1 // pred_fallthru
      _
    // Predicated region
    $region6: #{tpu_custom_call.1} parent=1 // pred_check
      _
    $region7: #{tpu_custom_call.1} parent=1 // pred_check_branch
      %22 = sbr.rel (0) target = $region9
    $region8: #{tpu_custom_call.1} parent=1 // pred_region
      %24 = vsyncadd [#allocation6], 0
      %s26 = sshll.u32 %s1, 4
      %s27 = int_to_ptr.hbm [resolvable:$true] %s26
      %s28 = sshll.u32 [#allocation5], 4
      %s29 = int_to_ptr.vmem [resolvable:$true] %s28
      %31 = dma.hbm_to_vmem [thread:$0]  %s27, 128, %s29, [#allocation6]
    $region9: #{tpu_custom_call.1} parent=1 // pred_fallthru
      _
    // Predicated region
    $region10: #{tpu_custom_call.1} parent=1 // pred_check
      _
    $region11: #{tpu_custom_call.1} parent=1 // pred_check_branch
      %33 = sbr.rel (0) target = $region13
    $region12: #{tpu_custom_call.1} parent=1 // pred_region
      %35 = dma.done [#allocation3], 256
    $region13: #{tpu_custom_call.1} parent=1 // pred_fallthru
      _
    // Predicated region
    $region14: #{tpu_custom_call.1} parent=1 // pred_check
      _
    $region15: #{tpu_custom_call.1} parent=1 // pred_check_branch
      %37 = sbr.rel (0) target = $region17
    $region16: #{tpu_custom_call.1} parent=1 // pred_region
      %39 = dma.done [#allocation6], 128
    $region17: #{tpu_custom_call.1} parent=1 // pred_fallthru
      _
    %v40 = vld [vmem:[#allocation2] sm:$0xff]
    %v41 = vld [vmem:[#allocation2 + $0x8] sm:$0xff]
    %v42 = vld [vmem:[#allocation5] sm:$0xff]
    %v44 = vperm.slane %v42, 0
    %v45 = vperm.slane %v42, 1
    %v46 = vperm.slane %v42, 2
    %v47 = vperm.slane %v42, 3
    %v48 = vperm.slane %v42, 4
    %v49 = vperm.slane %v42, 5
    %v50 = vperm.slane %v42, 6
    %v51 = vperm.slane %v42, 7
    %v52 = vrot.slane %v45, 6
    %v53 = vrot.slane %v46, 4
    %v54 = vrot.slane %v47, 2
    %v55 = vrot.slane %v49, 6
    %v56 = vrot.slane %v50, 4
    %v57 = vrot.slane %v51, 2
    %vm58 = vcmask 1041408
    %v59 = vsel %vm58, %v44, %v52
    %vm60 = vcmask 1045508
    %v61 = vsel %vm60, %v53, %v54
    %vm62 = vcmask 1043456
    %v63 = vsel %vm62, %v59, %v61
    %v64 = vsel %vm58, %v48, %v55
    %v65 = vsel %vm60, %v56, %v57
    %v66 = vsel %vm62, %v64, %v65
    %v69 = vmul.f32 %v40, %v63
    %v70 = vmul.f32 %v41, %v66
    %71 = vst [vmem:[#allocation7] sm:$0xff] %v69
    %72 = vst [vmem:[#allocation7 + $0x8] sm:$0xff] %v70
    // Predicated region
    $region18: #{tpu_custom_call.1} parent=1 // pred_check
      _
    $region19: #{tpu_custom_call.1} parent=1 // pred_check_branch
      %74 = sbr.rel (0) target = $region21
    $region20: #{tpu_custom_call.1} parent=1 // pred_region
      %76 = vsyncadd [#allocation4], 0
      %s78 = sshll.u32 [#allocation7], 4
      %s79 = int_to_ptr.vmem [resolvable:$true] %s78
      %s80 = sshll.u32 %s2, 4
      %s81 = int_to_ptr.hbm [resolvable:$true] %s80
      %83 = dma.vmem_to_hbm [thread:$0]  %s79, 256, %s81, [#allocation4]
    $region21: #{tpu_custom_call.1} parent=1 // pred_fallthru
      _
    // Predicated region
    $region22: #{tpu_custom_call.1} parent=1 // pred_check
      _
    $region23: #{tpu_custom_call.1} parent=1 // pred_check_branch
      %85 = sbr.rel (0) target = $region25
    $region24: #{tpu_custom_call.1} parent=1 // pred_region
      %87 = dma.done [#allocation4], 256
    $region25: #{tpu_custom_call.1} parent=1 // pred_fallthru
      _
    %88 = vsyncpa [#allocation3], 1
    %89 = vsyncpa [#allocation6], 1
    %90 = vsyncpa [#allocation4], 1

</llo_original>
